<compile_context>
chip_gen: v7x
topology: tpu7x:2x2x1
jax: 0.10.0
libtpu: 0.0.40
codegen_flags: <defaults>
</compile_context>

<pallas_src>
import functools

import jax
import jax.numpy as jnp
from jax import lax
from jax.experimental import pallas as pl
from jax.experimental.pallas import tpu as pltpu

# ----------------------- small, module-consistent shapes -----------------------
BS = 2             # batch
NVAR = 4           # module arg nvar
EMBED_DIM = 32     # module arg embed_dim (scaled down from 512)
INTER_DIM = 16     # module arg inter_dim (scaled down from 256)
SEQ_LEN = 12       # L
C = NVAR * EMBED_DIM           # 128 channels after the reshape
BN_EPS = 1e-5
SQRT_HALF = 0.7071067811865476


# ----------------------------- fused Pallas kernel -----------------------------
def _spatial_recon_kernel(x_ref, p_ref, w1_ref, w2_ref, o_ref, *, eps, bs, length,
                          inter, nvar):
    """Fused BatchNorm1d (train-mode batch stats) -> conv1(1x1)+GELU -> conv2(1x1).

    x_ref : (bs, C, L)    channel-major (native PyTorch layout) -- no transposes needed
    p_ref : (C, 4)        packed params: [:,0]=bn_gamma, [:,1]=bn_beta,
                          [:inter,2]=conv1 bias, [:nvar,3]=conv2 bias
    w1_ref: (inter, C)    conv1 weight, PyTorch (out_ch, in_ch) orientation
    w2_ref: (nvar, inter) conv2 weight
    o_ref : (bs, nvar, L) final output layout -- no wrapper-side relayout afterwards
    """
    n = bs * length
    xs = [x_ref[i] for i in range(bs)]                    # bs is static -> unrolled

    # BatchNorm1d training behaviour: per-channel biased stats over (batch, length).
    mu = sum(jnp.sum(xb, axis=1, keepdims=True) for xb in xs) * (1.0 / n)        # (C,1)
    var = sum(jnp.sum((xb - mu) ** 2, axis=1, keepdims=True) for xb in xs) * (1.0 / n)

    p = p_ref[...]
    gamma, beta = p[:, 0:1], p[:, 1:2]                    # (C,1) each
    b1 = p[0:inter, 2:3]                                  # (inter,1)
    b2 = p[0:nvar, 3:4]                                   # (nvar,1)
    scale = lax.rsqrt(var + eps) * gamma                  # (C,1)
    shift = beta - mu * scale

    w1 = w1_ref[...]
    w2 = w2_ref[...]
    for i, xb in enumerate(xs):
        xn = xb * scale + shift                                           # (C,L)  VPU
        h = jnp.dot(w1, xn, preferred_element_type=jnp.float32) + b1      # (inter,L) MXU
        h = 0.5 * h * (1.0 + lax.erf(h * SQRT_HALF))                      # exact GELU
        # Second 1x1 conv: small, MXU-starved, but cheaper than an FMA broadcast loop.
        y = jnp.dot(w2, h, preferred_element_type=jnp.float32) + b2       # (nvar,L)
        o_ref[i] = y.astype(o_ref.dtype)                                  # (nvar,L) store


# ----------------------------- wrapper -----------------------------
def pack_params(params):
    """One-time (init-time) packing of the small per-channel vectors into one (C, 4)
    slab so the kernel prologue issues 4 input DMAs instead of 7."""
    c = params["bn_g"].shape[0]
    inter = params["b1"].shape[0]
    nvar = params["b2"].shape[0]
    slab = jnp.zeros((c, 4), jnp.float32)
    slab = slab.at[:, 0].set(params["bn_g"])
    slab = slab.at[:, 1].set(params["bn_b"])
    slab = slab.at[:inter, 2].set(params["b1"])
    slab = slab.at[:nvar, 3].set(params["b2"])
    return {"slab": slab, "w1": params["w1"], "w2": params["w2"]}


@functools.partial(jax.jit, static_argnames=("nvar", "eps"))
def spatial_recon_forward(x, packed, nvar=NVAR, eps=BN_EPS):
    """x: (bs*nvar, E, L) float32  ->  (bs, nvar, L), matching Spatial_recon.forward."""
    bv, e, length = x.shape
    bs = bv // nvar
    c = nvar * e
    inter = packed["w1"].shape[0]

    # Pure contiguous reshape (no transpose, no data movement) == torch.reshape.
    xr = x.reshape(bs, c, length)

    flops = bs * length * (6 * c + 2 * inter * c + 8 * inter + 2 * nvar * inter + 2 * nvar)
    transcendentals = bs * length * inter + c                 # erf per hidden elem + rsqrt
    bytes_accessed = 4 * (xr.size + packed["slab"].size + packed["w1"].size
                          + packed["w2"].size + bs * nvar * length)

    vmem = pl.BlockSpec(memory_space=pltpu.MemorySpace.VMEM)
    return pl.pallas_call(
        functools.partial(_spatial_recon_kernel, eps=eps, bs=bs, length=length,
                          inter=inter, nvar=nvar),
        out_shape=jax.ShapeDtypeStruct((bs, nvar, length), jnp.float32),
        in_specs=[vmem, vmem, vmem, vmem],
        out_specs=vmem,
        cost_estimate=pl.CostEstimate(flops=flops, transcendentals=transcendentals,
                                      bytes_accessed=bytes_accessed),
    )(xr, packed["slab"], packed["w1"], packed["w2"])


# ----------------------------- pure-JAX reference -----------------------------
def spatial_recon_ref(x, params, nvar=NVAR, eps=BN_EPS):
    bv, e, length = x.shape
    bs = bv // nvar
    c = nvar * e
    xr = x.reshape(bs, c, length)
    mu = jnp.mean(xr, axis=(0, 2), keepdims=True)
    var = jnp.mean((xr - mu) ** 2, axis=(0, 2), keepdims=True)
    xn = (xr - mu) / jnp.sqrt(var + eps)
    xn = xn * params["bn_g"][None, :, None] + params["bn_b"][None, :, None]
    h = jnp.einsum("oc,bcl->bol", params["w1"], xn) + params["b1"][None, :, None]
    h = 0.5 * h * (1.0 + lax.erf(h * SQRT_HALF))
    y = jnp.einsum("vi,bil->bvl", params["w2"], h) + params["b2"][None, :, None]
    return y


# ----------------------------- driver -----------------------------
if __name__ == "__main__":
    key = jax.random.PRNGKey(0)
    kx, kg, kb, kw1, kb1, kw2, kb2 = jax.random.split(key, 7)

    x = jax.random.normal(kx, (BS * NVAR, EMBED_DIM, SEQ_LEN), jnp.float32)
    params = dict(
        bn_g=1.0 + 0.05 * jax.random.normal(kg, (C,), jnp.float32),
        bn_b=0.05 * jax.random.normal(kb, (C,), jnp.float32),
        # PyTorch Conv1d weight orientation (out_channels, in_channels), kernel_size=1.
        w1=0.05 * jax.random.normal(kw1, (INTER_DIM, C), jnp.float32),
        b1=0.05 * jax.random.normal(kb1, (INTER_DIM,), jnp.float32),
        w2=0.05 * jax.random.normal(kw2, (NVAR, INTER_DIM), jnp.float32),
        b2=0.05 * jax.random.normal(kb2, (NVAR,), jnp.float32),
    )

    packed = jax.tree_util.tree_map(jax.block_until_ready, pack_params(params))  # init-time

    out = spatial_recon_forward(x, packed)
    jax.block_until_ready(out)

    assert out.shape == (BS, NVAR, SEQ_LEN)
    ref = spatial_recon_ref(x, params)
    max_err = float(jnp.max(jnp.abs(out - ref)))
    assert jnp.allclose(out, ref, atol=2e-3, rtol=2e-3), f"max abs err {max_err}"
    assert bool(jnp.all(jnp.isfinite(out)))
    print("KERNEL_OK")
</pallas_src>

<mosaic_0001>
module attributes {stable_mosaic.version = 11 : i64} {
  func.func @_spatial_recon_kernel(%arg0: memref<2x128x12xf32, #tpu.memory_space<vmem>>, %arg1: memref<128x4xf32, #tpu.memory_space<vmem>>, %arg2: memref<16x128xf32, #tpu.memory_space<vmem>>, %arg3: memref<4x16xf32, #tpu.memory_space<vmem>>, %arg4: memref<2x4x12xf32, #tpu.memory_space<vmem>>) attributes {dimension_semantics = [], scalar_prefetch = 0 : i64, scratch_operands = 0 : i64, tpu.core_type = #tpu.core_type<tc>} {
    %c0 = arith.constant 0 : index
    %c0_0 = arith.constant 0 : index
    %c0_1 = arith.constant 0 : index
    %0 = vector.load %arg0[%c0, %c0_0, %c0_1] : memref<2x128x12xf32, #tpu.memory_space<vmem>>, vector<1x128x12xf32>
    %1 = vector.shape_cast %0 : vector<1x128x12xf32> to vector<128x12xf32>
    %c1 = arith.constant 1 : index
    %c0_2 = arith.constant 0 : index
    %c0_3 = arith.constant 0 : index
    %2 = vector.load %arg0[%c1, %c0_2, %c0_3] : memref<2x128x12xf32, #tpu.memory_space<vmem>>, vector<1x128x12xf32>
    %3 = vector.shape_cast %2 : vector<1x128x12xf32> to vector<128x12xf32>
    %cst = arith.constant dense<0.000000e+00> : vector<128xf32>
    %4 = vector.multi_reduction <add>, %1, %cst [1] : vector<128x12xf32> to vector<128xf32>
    %5 = vector.shape_cast %4 : vector<128xf32> to vector<128x1xf32>
    %cst_4 = arith.constant 0.000000e+00 : f32
    %6 = vector.broadcast %cst_4 : f32 to vector<128x1xf32>
    %7 = arith.addf %6, %5 : vector<128x1xf32>
    %cst_5 = arith.constant dense<0.000000e+00> : vector<128xf32>
    %8 = vector.multi_reduction <add>, %3, %cst_5 [1] : vector<128x12xf32> to vector<128xf32>
    %9 = vector.shape_cast %8 : vector<128xf32> to vector<128x1xf32>
    %10 = arith.addf %7, %9 : vector<128x1xf32>
    %cst_6 = arith.constant 0.0416666679 : f32
    %11 = vector.broadcast %cst_6 : f32 to vector<128x1xf32>
    %12 = arith.mulf %10, %11 : vector<128x1xf32>
    %13 = vector.broadcast %12 : vector<128x1xf32> to vector<128x12xf32>
    %14 = arith.subf %1, %13 : vector<128x12xf32>
    %15 = arith.mulf %14, %14 : vector<128x12xf32>
    %cst_7 = arith.constant dense<0.000000e+00> : vector<128xf32>
    %16 = vector.multi_reduction <add>, %15, %cst_7 [1] : vector<128x12xf32> to vector<128xf32>
    %17 = vector.shape_cast %16 : vector<128xf32> to vector<128x1xf32>
    %cst_8 = arith.constant 0.000000e+00 : f32
    %18 = vector.broadcast %cst_8 : f32 to vector<128x1xf32>
    %19 = arith.addf %18, %17 : vector<128x1xf32>
    %20 = vector.broadcast %12 : vector<128x1xf32> to vector<128x12xf32>
    %21 = arith.subf %3, %20 : vector<128x12xf32>
    %22 = arith.mulf %21, %21 : vector<128x12xf32>
    %cst_9 = arith.constant dense<0.000000e+00> : vector<128xf32>
    %23 = vector.multi_reduction <add>, %22, %cst_9 [1] : vector<128x12xf32> to vector<128xf32>
    %24 = vector.shape_cast %23 : vector<128xf32> to vector<128x1xf32>
    %25 = arith.addf %19, %24 : vector<128x1xf32>
    %cst_10 = arith.constant 0.0416666679 : f32
    %26 = vector.broadcast %cst_10 : f32 to vector<128x1xf32>
    %27 = arith.mulf %25, %26 : vector<128x1xf32>
    %c0_11 = arith.constant 0 : index
    %c0_12 = arith.constant 0 : index
    %28 = vector.load %arg1[%c0_11, %c0_12] : memref<128x4xf32, #tpu.memory_space<vmem>>, vector<128x4xf32>
    %29 = vector.extract_strided_slice %28 {offsets = [0, 0], sizes = [128, 1], strides = [1, 1]} : vector<128x4xf32> to vector<128x1xf32>
    %30 = vector.extract_strided_slice %28 {offsets = [0, 1], sizes = [128, 1], strides = [1, 1]} : vector<128x4xf32> to vector<128x1xf32>
    %31 = vector.extract_strided_slice %28 {offsets = [0, 2], sizes = [16, 1], strides = [1, 1]} : vector<128x4xf32> to vector<16x1xf32>
    %32 = vector.extract_strided_slice %28 {offsets = [0, 3], sizes = [4, 1], strides = [1, 1]} : vector<128x4xf32> to vector<4x1xf32>
    %cst_13 = arith.constant 9.99999974E-6 : f32
    %33 = vector.broadcast %cst_13 : f32 to vector<128x1xf32>
    %34 = arith.addf %27, %33 : vector<128x1xf32>
    %35 = math.rsqrt %34 : vector<128x1xf32>
    %36 = arith.mulf %35, %29 : vector<128x1xf32>
    %37 = arith.mulf %12, %36 : vector<128x1xf32>
    %38 = arith.subf %30, %37 : vector<128x1xf32>
    %c0_14 = arith.constant 0 : index
    %c0_15 = arith.constant 0 : index
    %39 = vector.load %arg2[%c0_14, %c0_15] : memref<16x128xf32, #tpu.memory_space<vmem>>, vector<16x128xf32>
    %c0_16 = arith.constant 0 : index
    %c0_17 = arith.constant 0 : index
    %40 = vector.load %arg3[%c0_16, %c0_17] : memref<4x16xf32, #tpu.memory_space<vmem>>, vector<4x16xf32>
    %41 = vector.broadcast %36 : vector<128x1xf32> to vector<128x12xf32>
    %42 = arith.mulf %1, %41 : vector<128x12xf32>
    %43 = vector.broadcast %38 : vector<128x1xf32> to vector<128x12xf32>
    %44 = arith.addf %42, %43 : vector<128x12xf32>
    %cst_18 = arith.constant dense<0.000000e+00> : vector<16x12xf32>
    %45 = tpu.matmul %39, %44, %cst_18 {dimension_numbers = #tpu.dot_dimension_numbers<[1], [0], [0], [1], [0, 0, 1, 1], [], []>} : vector<16x128xf32>, vector<128x12xf32>, vector<16x12xf32> -> vector<16x12xf32>
    %46 = vector.broadcast %31 : vector<16x1xf32> to vector<16x12xf32>
    %47 = arith.addf %45, %46 : vector<16x12xf32>
    %cst_19 = arith.constant 5.000000e-01 : f32
    %48 = vector.broadcast %cst_19 : f32 to vector<16x12xf32>
    %49 = arith.mulf %48, %47 : vector<16x12xf32>
    %cst_20 = arith.constant 0.707106769 : f32
    %50 = vector.broadcast %cst_20 : f32 to vector<16x12xf32>
    %51 = arith.mulf %47, %50 : vector<16x12xf32>
    %52 = math.erf %51 : vector<16x12xf32>
    %cst_21 = arith.constant 1.000000e+00 : f32
    %53 = vector.broadcast %cst_21 : f32 to vector<16x12xf32>
    %54 = arith.addf %53, %52 : vector<16x12xf32>
    %55 = arith.mulf %49, %54 : vector<16x12xf32>
    %cst_22 = arith.constant dense<0.000000e+00> : vector<4x12xf32>
    %56 = tpu.matmul %40, %55, %cst_22 {dimension_numbers = #tpu.dot_dimension_numbers<[1], [0], [0], [1], [0, 0, 1, 1], [], []>} : vector<4x16xf32>, vector<16x12xf32>, vector<4x12xf32> -> vector<4x12xf32>
    %57 = vector.broadcast %32 : vector<4x1xf32> to vector<4x12xf32>
    %58 = arith.addf %56, %57 : vector<4x12xf32>
    %c0_23 = arith.constant 0 : index
    %c0_24 = arith.constant 0 : index
    %c0_25 = arith.constant 0 : index
    %59 = vector.load %arg4[%c0_23, %c0_24, %c0_25] : memref<2x4x12xf32, #tpu.memory_space<vmem>>, vector<1x4x12xf32>
    %60 = vector.shape_cast %59 : vector<1x4x12xf32> to vector<4x12xf32>
    %61 = vector.shape_cast %58 : vector<4x12xf32> to vector<1x4x12xf32>
    tpu.vector_store %arg4[%c0_23, %c0_24, %c0_25], %61 {strides = array<i32>} : memref<2x4x12xf32, #tpu.memory_space<vmem>>, vector<1x4x12xf32>,
    %62 = vector.broadcast %36 : vector<128x1xf32> to vector<128x12xf32>
    %63 = arith.mulf %3, %62 : vector<128x12xf32>
    %64 = vector.broadcast %38 : vector<128x1xf32> to vector<128x12xf32>
    %65 = arith.addf %63, %64 : vector<128x12xf32>
    %cst_26 = arith.constant dense<0.000000e+00> : vector<16x12xf32>
    %66 = tpu.matmul %39, %65, %cst_26 {dimension_numbers = #tpu.dot_dimension_numbers<[1], [0], [0], [1], [0, 0, 1, 1], [], []>} : vector<16x128xf32>, vector<128x12xf32>, vector<16x12xf32> -> vector<16x12xf32>
    %67 = vector.broadcast %31 : vector<16x1xf32> to vector<16x12xf32>
    %68 = arith.addf %66, %67 : vector<16x12xf32>
    %cst_27 = arith.constant 5.000000e-01 : f32
    %69 = vector.broadcast %cst_27 : f32 to vector<16x12xf32>
    %70 = arith.mulf %69, %68 : vector<16x12xf32>
    %cst_28 = arith.constant 0.707106769 : f32
    %71 = vector.broadcast %cst_28 : f32 to vector<16x12xf32>
    %72 = arith.mulf %68, %71 : vector<16x12xf32>
    %73 = math.erf %72 : vector<16x12xf32>
    %cst_29 = arith.constant 1.000000e+00 : f32
    %74 = vector.broadcast %cst_29 : f32 to vector<16x12xf32>
    %75 = arith.addf %74, %73 : vector<16x12xf32>
    %76 = arith.mulf %70, %75 : vector<16x12xf32>
    %cst_30 = arith.constant dense<0.000000e+00> : vector<4x12xf32>
    %77 = tpu.matmul %40, %76, %cst_30 {dimension_numbers = #tpu.dot_dimension_numbers<[1], [0], [0], [1], [0, 0, 1, 1], [], []>} : vector<4x16xf32>, vector<16x12xf32>, vector<4x12xf32> -> vector<4x12xf32>
    %78 = vector.broadcast %32 : vector<4x1xf32> to vector<4x12xf32>
    %79 = arith.addf %77, %78 : vector<4x12xf32>
    %c1_31 = arith.constant 1 : index
    %c0_32 = arith.constant 0 : index
    %c0_33 = arith.constant 0 : index
    %80 = vector.load %arg4[%c1_31, %c0_32, %c0_33] : memref<2x4x12xf32, #tpu.memory_space<vmem>>, vector<1x4x12xf32>
    %81 = vector.shape_cast %80 : vector<1x4x12xf32> to vector<4x12xf32>
    %82 = vector.shape_cast %79 : vector<4x12xf32> to vector<1x4x12xf32>
    tpu.vector_store %arg4[%c1_31, %c0_32, %c0_33], %82 {strides = array<i32>} : memref<2x4x12xf32, #tpu.memory_space<vmem>>, vector<1x4x12xf32>,
    return
  }
}

</mosaic_0001>

<llo_original>
// kernel: spatial_recon_forward.1
$region0: #{spatial_recon_forward.1}
  #allocation0 [shape = 'u32[]', space=smem, size = 0x4, offset = 0x4, fixed_abs, tag = 'smem constant byte address 0x4 - core index']
  #allocation1 [shape = 'u32[144,128]{1,0:T(1,128)}', space=vmem, size = 0x12000, scoped, tag = 'internal scratch']
  %s0 = inlined_call_operand.vmem [shape: f32[2,128,12], index: 0, kind: input, shape index: {}]
  %s1 = inlined_call_operand.vmem [shape: f32[128,4], index: 1, kind: input, shape index: {}]
  %s2 = inlined_call_operand.vmem [shape: f32[16,128], index: 2, kind: input, shape index: {}]
  %s3 = inlined_call_operand.vmem [shape: f32[4,16], index: 3, kind: input, shape index: {}]
  %s4 = inlined_call_operand.hbm [shape: f32[2,4,12], index: 4, kind: output, shape index: {}]
  %s5 = sld [smem:[#allocation0]]
  $region26: #{spatial_recon_forward.1} parent=0
    _
  %s7 = ssub.s32 1, %s5
  %s8 = scalar_select 0, %s7, %s5
  $region1: #{spatial_recon_forward.1} parent=0
    #allocation2 [shape = 'u8[4096]{0}', space=vmem, size = 0x1000, scoped, tag = 'output window, operand 0, single buffered']
    #allocation3 [shape = 's32[1]{0}', space=sflag, size = 0x4, scoped, tag = 'scoped memory for spatial_recon_forward.1']
    %9 = vsyncpa [#allocation3], 0
    // Predicated region
    $region2: #{spatial_recon_forward.1} parent=1 // pred_check
      _
    $region3: #{spatial_recon_forward.1} parent=1 // pred_check_branch
      %11 = sbr.rel (0) target = $region5
    $region4: #{spatial_recon_forward.1} parent=1 // pred_region
      _
    $region5: #{spatial_recon_forward.1} parent=1 // pred_fallthru
      _
    // Predicated region
    $region6: #{spatial_recon_forward.1} parent=1 // pred_check
      _
    $region7: #{spatial_recon_forward.1} parent=1 // pred_check_branch
      %13 = sbr.rel (0) target = $region9
    $region8: #{spatial_recon_forward.1} parent=1 // pred_region
      _
    $region9: #{spatial_recon_forward.1} parent=1 // pred_fallthru
      _
    // Predicated region
    $region10: #{spatial_recon_forward.1} parent=1 // pred_check
      _
    $region11: #{spatial_recon_forward.1} parent=1 // pred_check_branch
      %15 = sbr.rel (0) target = $region13
    $region12: #{spatial_recon_forward.1} parent=1 // pred_region
      _
    $region13: #{spatial_recon_forward.1} parent=1 // pred_fallthru
      _
    // Predicated region
    $region14: #{spatial_recon_forward.1} parent=1 // pred_check
      _
    $region15: #{spatial_recon_forward.1} parent=1 // pred_check_branch
      %17 = sbr.rel (0) target = $region17
    $region16: #{spatial_recon_forward.1} parent=1 // pred_region
      _
    $region17: #{spatial_recon_forward.1} parent=1 // pred_fallthru
      _
    %v18 = vld [vmem:[%s0] sm:$0xff]
    %v19 = vld [vmem:[%s0 + $0x8] sm:$0xff]
    %v20 = vld [vmem:[%s0 + $0x10] sm:$0xff]
    %v21 = vld [vmem:[%s0 + $0x18] sm:$0xff]
    %v22 = vld [vmem:[%s0 + $0x20] sm:$0xff]
    %v23 = vld [vmem:[%s0 + $0x28] sm:$0xff]
    %v24 = vld [vmem:[%s0 + $0x30] sm:$0xff]
    %v25 = vld [vmem:[%s0 + $0x38] sm:$0xff]
    %v26 = vld [vmem:[%s0 + $0x40] sm:$0xff]
    %v27 = vld [vmem:[%s0 + $0x48] sm:$0xff]
    %v28 = vld [vmem:[%s0 + $0x50] sm:$0xff]
    %v29 = vld [vmem:[%s0 + $0x58] sm:$0xff]
    %v30 = vld [vmem:[%s0 + $0x60] sm:$0xff]
    %v31 = vld [vmem:[%s0 + $0x68] sm:$0xff]
    %v32 = vld [vmem:[%s0 + $0x70] sm:$0xff]
    %v33 = vld [vmem:[%s0 + $0x78] sm:$0xff]
    %s34 = scalar_lea.vmem %s0, 128
    %v35 = vld [vmem:[%s34] sm:$0xff]
    %v36 = vld [vmem:[%s34 + $0x8] sm:$0xff]
    %v37 = vld [vmem:[%s34 + $0x10] sm:$0xff]
    %v38 = vld [vmem:[%s34 + $0x18] sm:$0xff]
    %v39 = vld [vmem:[%s34 + $0x20] sm:$0xff]
    %v40 = vld [vmem:[%s34 + $0x28] sm:$0xff]
    %v41 = vld [vmem:[%s34 + $0x30] sm:$0xff]
    %v42 = vld [vmem:[%s34 + $0x38] sm:$0xff]
    %v43 = vld [vmem:[%s34 + $0x40] sm:$0xff]
    %v44 = vld [vmem:[%s34 + $0x48] sm:$0xff]
    %v45 = vld [vmem:[%s34 + $0x50] sm:$0xff]
    %v46 = vld [vmem:[%s34 + $0x58] sm:$0xff]
    %v47 = vld [vmem:[%s34 + $0x60] sm:$0xff]
    %v48 = vld [vmem:[%s34 + $0x68] sm:$0xff]
    %v49 = vld [vmem:[%s34 + $0x70] sm:$0xff]
    %v50 = vld [vmem:[%s34 + $0x78] sm:$0xff]
    %vm51 = vcmask 97280
    %v52 = vsel %vm51, %v18, 0.0
    %53 = vadd.xlane.f32.xlu0 %v52
    %v54 = vpop.xlane.xlu0 %53
    %v55 = vsel %vm51, %v19, 0.0
    %56 = vadd.xlane.f32.xlu0 %v55
    %v57 = vpop.xlane.xlu0 %56
    %v58 = vsel %vm51, %v20, 0.0
    %59 = vadd.xlane.f32.xlu0 %v58
    %v60 = vpop.xlane.xlu0 %59
    %v61 = vsel %vm51, %v21, 0.0
    %62 = vadd.xlane.f32.xlu0 %v61
    %v63 = vpop.xlane.xlu0 %62
    %v64 = vsel %vm51, %v22, 0.0
    %65 = vadd.xlane.f32.xlu0 %v64
    %v66 = vpop.xlane.xlu0 %65
    %v67 = vsel %vm51, %v23, 0.0
    %68 = vadd.xlane.f32.xlu0 %v67
    %v69 = vpop.xlane.xlu0 %68
    %v70 = vsel %vm51, %v24, 0.0
    %71 = vadd.xlane.f32.xlu0 %v70
    %v72 = vpop.xlane.xlu0 %71
    %v73 = vsel %vm51, %v25, 0.0
    %74 = vadd.xlane.f32.xlu0 %v73
    %v75 = vpop.xlane.xlu0 %74
    %v76 = vsel %vm51, %v26, 0.0
    %77 = vadd.xlane.f32.xlu0 %v76
    %v78 = vpop.xlane.xlu0 %77
    %v79 = vsel %vm51, %v27, 0.0
    %80 = vadd.xlane.f32.xlu0 %v79
    %v81 = vpop.xlane.xlu0 %80
    %v82 = vsel %vm51, %v28, 0.0
    %83 = vadd.xlane.f32.xlu0 %v82
    %v84 = vpop.xlane.xlu0 %83
    %v85 = vsel %vm51, %v29, 0.0
    %86 = vadd.xlane.f32.xlu0 %v85
    %v87 = vpop.xlane.xlu0 %86
    %v88 = vsel %vm51, %v30, 0.0
    %89 = vadd.xlane.f32.xlu0 %v88
    %v90 = vpop.xlane.xlu0 %89
    %v91 = vsel %vm51, %v31, 0.0
    %92 = vadd.xlane.f32.xlu0 %v91
    %v93 = vpop.xlane.xlu0 %92
    %v94 = vsel %vm51, %v32, 0.0
    %95 = vadd.xlane.f32.xlu0 %v94
    %v96 = vpop.xlane.xlu0 %95
    %v97 = vsel %vm51, %v33, 0.0
    %98 = vadd.xlane.f32.xlu0 %v97
    %v99 = vpop.xlane.xlu0 %98
    %v100 = vadd.f32 %v54, 0.0
    %v101 = vadd.f32 %v57, 0.0
    %v102 = vadd.f32 %v60, 0.0
    %v103 = vadd.f32 %v63, 0.0
    %v104 = vadd.f32 %v66, 0.0
    %v105 = vadd.f32 %v69, 0.0
    %v106 = vadd.f32 %v72, 0.0
    %v107 = vadd.f32 %v75, 0.0
    %v108 = vadd.f32 %v78, 0.0
    %v109 = vadd.f32 %v81, 0.0
    %v110 = vadd.f32 %v84, 0.0
    %v111 = vadd.f32 %v87, 0.0
    %v112 = vadd.f32 %v90, 0.0
    %v113 = vadd.f32 %v93, 0.0
    %v114 = vadd.f32 %v96, 0.0
    %v115 = vadd.f32 %v99, 0.0
    %v116 = vsel %vm51, %v35, 0.0
    %117 = vadd.xlane.f32.xlu0 %v116
    %v118 = vpop.xlane.xlu0 %117
    %v119 = vsel %vm51, %v36, 0.0
    %120 = vadd.xlane.f32.xlu0 %v119
    %v121 = vpop.xlane.xlu0 %120
    %v122 = vsel %vm51, %v37, 0.0
    %123 = vadd.xlane.f32.xlu0 %v122
    %v124 = vpop.xlane.xlu0 %123
    %v125 = vsel %vm51, %v38, 0.0
    %126 = vadd.xlane.f32.xlu0 %v125
    %v127 = vpop.xlane.xlu0 %126
    %v128 = vsel %vm51, %v39, 0.0
    %129 = vadd.xlane.f32.xlu0 %v128
    %v130 = vpop.xlane.xlu0 %129
    %v131 = vsel %vm51, %v40, 0.0
    %132 = vadd.xlane.f32.xlu0 %v131
    %v133 = vpop.xlane.xlu0 %132
    %v134 = vsel %vm51, %v41, 0.0
    %135 = vadd.xlane.f32.xlu0 %v134
    %v136 = vpop.xlane.xlu0 %135
    %v137 = vsel %vm51, %v42, 0.0
    %138 = vadd.xlane.f32.xlu0 %v137
    %v139 = vpop.xlane.xlu0 %138
    %v140 = vsel %vm51, %v43, 0.0
    %141 = vadd.xlane.f32.xlu0 %v140
    %v142 = vpop.xlane.xlu0 %141
    %v143 = vsel %vm51, %v44, 0.0
    %144 = vadd.xlane.f32.xlu0 %v143
    %v145 = vpop.xlane.xlu0 %144
    %v146 = vsel %vm51, %v45, 0.0
    %147 = vadd.xlane.f32.xlu0 %v146
    %v148 = vpop.xlane.xlu0 %147
    %v149 = vsel %vm51, %v46, 0.0
    %150 = vadd.xlane.f32.xlu0 %v149
    %v151 = vpop.xlane.xlu0 %150
    %v152 = vsel %vm51, %v47, 0.0
    %153 = vadd.xlane.f32.xlu0 %v152
    %v154 = vpop.xlane.xlu0 %153
    %v155 = vsel %vm51, %v48, 0.0
    %156 = vadd.xlane.f32.xlu0 %v155
    %v157 = vpop.xlane.xlu0 %156
    %v158 = vsel %vm51, %v49, 0.0
    %159 = vadd.xlane.f32.xlu0 %v158
    %v160 = vpop.xlane.xlu0 %159
    %v161 = vsel %vm51, %v50, 0.0
    %162 = vadd.xlane.f32.xlu0 %v161
    %v163 = vpop.xlane.xlu0 %162
    %v164 = vadd.f32 %v100, %v118
    %v165 = vadd.f32 %v101, %v121
    %v166 = vadd.f32 %v102, %v124
    %v167 = vadd.f32 %v103, %v127
    %v168 = vadd.f32 %v104, %v130
    %v169 = vadd.f32 %v105, %v133
    %v170 = vadd.f32 %v106, %v136
    %v171 = vadd.f32 %v107, %v139
    %v172 = vadd.f32 %v108, %v142
    %v173 = vadd.f32 %v109, %v145
    %v174 = vadd.f32 %v110, %v148
    %v175 = vadd.f32 %v111, %v151
    %v176 = vadd.f32 %v112, %v154
    %v177 = vadd.f32 %v113, %v157
    %v178 = vadd.f32 %v114, %v160
    %v179 = vadd.f32 %v115, %v163
    %v180 = vmul.f32 %v164, 0.041666668
    %v181 = vmul.f32 %v165, 0.041666668
    %v182 = vmul.f32 %v166, 0.041666668
    %v183 = vmul.f32 %v167, 0.041666668
    %v184 = vmul.f32 %v168, 0.041666668
    %v185 = vmul.f32 %v169, 0.041666668
    %v186 = vmul.f32 %v170, 0.041666668
    %v187 = vmul.f32 %v171, 0.041666668
    %v188 = vmul.f32 %v172, 0.041666668
    %v189 = vmul.f32 %v173, 0.041666668
    %v190 = vmul.f32 %v174, 0.041666668
    %v191 = vmul.f32 %v175, 0.041666668
    %v192 = vmul.f32 %v176, 0.041666668
    %v193 = vmul.f32 %v177, 0.041666668
    %v194 = vmul.f32 %v178, 0.041666668
    %v195 = vmul.f32 %v179, 0.041666668
    %v196 = vsub.f32 %v18, %v180
    %v197 = vsub.f32 %v19, %v181
    %v198 = vsub.f32 %v20, %v182
    %v199 = vsub.f32 %v21, %v183
    %v200 = vsub.f32 %v22, %v184
    %v201 = vsub.f32 %v23, %v185
    %v202 = vsub.f32 %v24, %v186
    %v203 = vsub.f32 %v25, %v187
    %v204 = vsub.f32 %v26, %v188
    %v205 = vsub.f32 %v27, %v189
    %v206 = vsub.f32 %v28, %v190
    %v207 = vsub.f32 %v29, %v191
    %v208 = vsub.f32 %v30, %v192
    %v209 = vsub.f32 %v31, %v193
    %v210 = vsub.f32 %v32, %v194
    %v211 = vsub.f32 %v33, %v195
    %v212 = vmul.f32 %v196, %v196
    %v213 = vmul.f32 %v197, %v197
    %v214 = vmul.f32 %v198, %v198
    %v215 = vmul.f32 %v199, %v199
    %v216 = vmul.f32 %v200, %v200
    %v217 = vmul.f32 %v201, %v201
    %v218 = vmul.f32 %v202, %v202
    %v219 = vmul.f32 %v203, %v203
    %v220 = vmul.f32 %v204, %v204
    %v221 = vmul.f32 %v205, %v205
    %v222 = vmul.f32 %v206, %v206
    %v223 = vmul.f32 %v207, %v207
    %v224 = vmul.f32 %v208, %v208
    %v225 = vmul.f32 %v209, %v209
    %v226 = vmul.f32 %v210, %v210
    %v227 = vmul.f32 %v211, %v211
    %v228 = vsel %vm51, %v212, 0.0
    %229 = vadd.xlane.f32.xlu0 %v228
    %v230 = vpop.xlane.xlu0 %229
    %v231 = vsel %vm51, %v213, 0.0
    %232 = vadd.xlane.f32.xlu0 %v231
    %v233 = vpop.xlane.xlu0 %232
    %v234 = vsel %vm51, %v214, 0.0
    %235 = vadd.xlane.f32.xlu0 %v234
    %v236 = vpop.xlane.xlu0 %235
    %v237 = vsel %vm51, %v215, 0.0
    %238 = vadd.xlane.f32.xlu0 %v237
    %v239 = vpop.xlane.xlu0 %238
    %v240 = vsel %vm51, %v216, 0.0
    %241 = vadd.xlane.f32.xlu0 %v240
    %v242 = vpop.xlane.xlu0 %241
    %v243 = vsel %vm51, %v217, 0.0
    %244 = vadd.xlane.f32.xlu0 %v243
    %v245 = vpop.xlane.xlu0 %244
    %v246 = vsel %vm51, %v218, 0.0
    %247 = vadd.xlane.f32.xlu0 %v246
    %v248 = vpop.xlane.xlu0 %247
    %v249 = vsel %vm51, %v219, 0.0
    %250 = vadd.xlane.f32.xlu0 %v249
    %v251 = vpop.xlane.xlu0 %250
    %v252 = vsel %vm51, %v220, 0.0
    %253 = vadd.xlane.f32.xlu0 %v252
    %v254 = vpop.xlane.xlu0 %253
    %v255 = vsel %vm51, %v221, 0.0
    %256 = vadd.xlane.f32.xlu0 %v255
    %v257 = vpop.xlane.xlu0 %256
    %v258 = vsel %vm51, %v222, 0.0
    %259 = vadd.xlane.f32.xlu0 %v258
    %v260 = vpop.xlane.xlu0 %259
    %v261 = vsel %vm51, %v223, 0.0
    %262 = vadd.xlane.f32.xlu0 %v261
    %v263 = vpop.xlane.xlu0 %262
    %v264 = vsel %vm51, %v224, 0.0
    %265 = vadd.xlane.f32.xlu0 %v264
    %v266 = vpop.xlane.xlu0 %265
    %v267 = vsel %vm51, %v225, 0.0
    %268 = vadd.xlane.f32.xlu0 %v267
    %v269 = vpop.xlane.xlu0 %268
    %v270 = vsel %vm51, %v226, 0.0
    %271 = vadd.xlane.f32.xlu0 %v270
    %v272 = vpop.xlane.xlu0 %271
    %v273 = vsel %vm51, %v227, 0.0
    %274 = vadd.xlane.f32.xlu0 %v273
    %v275 = vpop.xlane.xlu0 %274
    %v276 = vadd.f32 %v230, 0.0
    %v277 = vadd.f32 %v233, 0.0
    %v278 = vadd.f32 %v236, 0.0
    %v279 = vadd.f32 %v239, 0.0
    %v280 = vadd.f32 %v242, 0.0
    %v281 = vadd.f32 %v245, 0.0
    %v282 = vadd.f32 %v248, 0.0
    %v283 = vadd.f32 %v251, 0.0
    %v284 = vadd.f32 %v254, 0.0
    %v285 = vadd.f32 %v257, 0.0
    %v286 = vadd.f32 %v260, 0.0
    %v287 = vadd.f32 %v263, 0.0
    %v288 = vadd.f32 %v266, 0.0
    %v289 = vadd.f32 %v269, 0.0
    %v290 = vadd.f32 %v272, 0.0
    %v291 = vadd.f32 %v275, 0.0
    %v292 = vsub.f32 %v35, %v180
    %v293 = vsub.f32 %v36, %v181
    %v294 = vsub.f32 %v37, %v182
    %v295 = vsub.f32 %v38, %v183
    %v296 = vsub.f32 %v39, %v184
    %v297 = vsub.f32 %v40, %v185
    %v298 = vsub.f32 %v41, %v186
    %v299 = vsub.f32 %v42, %v187
    %v300 = vsub.f32 %v43, %v188
    %v301 = vsub.f32 %v44, %v189
    %v302 = vsub.f32 %v45, %v190
    %v303 = vsub.f32 %v46, %v191
    %v304 = vsub.f32 %v47, %v192
    %v305 = vsub.f32 %v48, %v193
    %v306 = vsub.f32 %v49, %v194
    %v307 = vsub.f32 %v50, %v195
    %v308 = vmul.f32 %v292, %v292
    %v309 = vmul.f32 %v293, %v293
    %v310 = vmul.f32 %v294, %v294
    %v311 = vmul.f32 %v295, %v295
    %v312 = vmul.f32 %v296, %v296
    %v313 = vmul.f32 %v297, %v297
    %v314 = vmul.f32 %v298, %v298
    %v315 = vmul.f32 %v299, %v299
    %v316 = vmul.f32 %v300, %v300
    %v317 = vmul.f32 %v301, %v301
    %v318 = vmul.f32 %v302, %v302
    %v319 = vmul.f32 %v303, %v303
    %v320 = vmul.f32 %v304, %v304
    %v321 = vmul.f32 %v305, %v305
    %v322 = vmul.f32 %v306, %v306
    %v323 = vmul.f32 %v307, %v307
    %v324 = vsel %vm51, %v308, 0.0
    %325 = vadd.xlane.f32.xlu0 %v324
    %v326 = vpop.xlane.xlu0 %325
    %v327 = vsel %vm51, %v309, 0.0
    %328 = vadd.xlane.f32.xlu0 %v327
    %v329 = vpop.xlane.xlu0 %328
    %v330 = vsel %vm51, %v310, 0.0
    %331 = vadd.xlane.f32.xlu0 %v330
    %v332 = vpop.xlane.xlu0 %331
    %v333 = vsel %vm51, %v311, 0.0
    %334 = vadd.xlane.f32.xlu0 %v333
    %v335 = vpop.xlane.xlu0 %334
    %v336 = vsel %vm51, %v312, 0.0
    %337 = vadd.xlane.f32.xlu0 %v336
    %v338 = vpop.xlane.xlu0 %337
    %v339 = vsel %vm51, %v313, 0.0
    %340 = vadd.xlane.f32.xlu0 %v339
    %v341 = vpop.xlane.xlu0 %340
    %v342 = vsel %vm51, %v314, 0.0
    %343 = vadd.xlane.f32.xlu0 %v342
    %v344 = vpop.xlane.xlu0 %343
    %v345 = vsel %vm51, %v315, 0.0
    %346 = vadd.xlane.f32.xlu0 %v345
    %v347 = vpop.xlane.xlu0 %346
    %v348 = vsel %vm51, %v316, 0.0
    %349 = vadd.xlane.f32.xlu0 %v348
    %v350 = vpop.xlane.xlu0 %349
    %v351 = vsel %vm51, %v317, 0.0
    %352 = vadd.xlane.f32.xlu0 %v351
    %v353 = vpop.xlane.xlu0 %352
    %v354 = vsel %vm51, %v318, 0.0
    %355 = vadd.xlane.f32.xlu0 %v354
    %v356 = vpop.xlane.xlu0 %355
    %v357 = vsel %vm51, %v319, 0.0
    %358 = vadd.xlane.f32.xlu0 %v357
    %v359 = vpop.xlane.xlu0 %358
    %v360 = vsel %vm51, %v320, 0.0
    %361 = vadd.xlane.f32.xlu0 %v360
    %v362 = vpop.xlane.xlu0 %361
    %v363 = vsel %vm51, %v321, 0.0
    %364 = vadd.xlane.f32.xlu0 %v363
    %v365 = vpop.xlane.xlu0 %364
    %v366 = vsel %vm51, %v322, 0.0
    %367 = vadd.xlane.f32.xlu0 %v366
    %v368 = vpop.xlane.xlu0 %367
    %v369 = vsel %vm51, %v323, 0.0
    %370 = vadd.xlane.f32.xlu0 %v369
    %v371 = vpop.xlane.xlu0 %370
    %v372 = vadd.f32 %v276, %v326
    %v373 = vadd.f32 %v277, %v329
    %v374 = vadd.f32 %v278, %v332
    %v375 = vadd.f32 %v279, %v335
    %v376 = vadd.f32 %v280, %v338
    %v377 = vadd.f32 %v281, %v341
    %v378 = vadd.f32 %v282, %v344
    %v379 = vadd.f32 %v283, %v347
    %v380 = vadd.f32 %v284, %v350
    %v381 = vadd.f32 %v285, %v353
    %v382 = vadd.f32 %v286, %v356
    %v383 = vadd.f32 %v287, %v359
    %v384 = vadd.f32 %v288, %v362
    %v385 = vadd.f32 %v289, %v365
    %v386 = vadd.f32 %v290, %v368
    %v387 = vadd.f32 %v291, %v371
    %v388 = vmul.f32 %v372, 0.041666668
    %v389 = vmul.f32 %v373, 0.041666668
    %v390 = vmul.f32 %v374, 0.041666668
    %v391 = vmul.f32 %v375, 0.041666668
    %v392 = vmul.f32 %v376, 0.041666668
    %v393 = vmul.f32 %v377, 0.041666668
    %v394 = vmul.f32 %v378, 0.041666668
    %v395 = vmul.f32 %v379, 0.041666668
    %v396 = vmul.f32 %v380, 0.041666668
    %v397 = vmul.f32 %v381, 0.041666668
    %v398 = vmul.f32 %v382, 0.041666668
    %v399 = vmul.f32 %v383, 0.041666668
    %v400 = vmul.f32 %v384, 0.041666668
    %v401 = vmul.f32 %v385, 0.041666668
    %v402 = vmul.f32 %v386, 0.041666668
    %v403 = vmul.f32 %v387, 0.041666668
    %v404 = vld [vmem:[%s1] sm:$0xff]
    %v405 = vld [vmem:[%s1 + $0x8] sm:$0xff]
    %v406 = vld [vmem:[%s1 + $0x10] sm:$0xff]
    %v407 = vld [vmem:[%s1 + $0x18] sm:$0xff]
    %v408 = vld [vmem:[%s1 + $0x20] sm:$0xff]
    %v409 = vld [vmem:[%s1 + $0x28] sm:$0xff]
    %v410 = vld [vmem:[%s1 + $0x30] sm:$0xff]
    %v411 = vld [vmem:[%s1 + $0x38] sm:$0xff]
    %v412 = vld [vmem:[%s1 + $0x40] sm:$0xff]
    %v413 = vld [vmem:[%s1 + $0x48] sm:$0xff]
    %v414 = vld [vmem:[%s1 + $0x50] sm:$0xff]
    %v415 = vld [vmem:[%s1 + $0x58] sm:$0xff]
    %v416 = vld [vmem:[%s1 + $0x60] sm:$0xff]
    %v417 = vld [vmem:[%s1 + $0x68] sm:$0xff]
    %v418 = vld [vmem:[%s1 + $0x70] sm:$0xff]
    %v419 = vld [vmem:[%s1 + $0x78] sm:$0xff]
    %v420 = vadd.f32 %v388, 1e-05
    %v421 = vadd.f32 %v389, 1e-05
    %v422 = vadd.f32 %v390, 1e-05
    %v423 = vadd.f32 %v391, 1e-05
    %v424 = vadd.f32 %v392, 1e-05
    %v425 = vadd.f32 %v393, 1e-05
    %v426 = vadd.f32 %v394, 1e-05
    %v427 = vadd.f32 %v395, 1e-05
    %v428 = vadd.f32 %v396, 1e-05
    %v429 = vadd.f32 %v397, 1e-05
    %v430 = vadd.f32 %v398, 1e-05
    %v431 = vadd.f32 %v399, 1e-05
    %v432 = vadd.f32 %v400, 1e-05
    %v433 = vadd.f32 %v401, 1e-05
    %v434 = vadd.f32 %v402, 1e-05
    %v435 = vadd.f32 %v403, 1e-05
    %v436 = vrsqrt.pop %v420
    %v437 = vrsqrt.pop %v421
    %v438 = vrsqrt.pop %v422
    %v439 = vrsqrt.pop %v423
    %v440 = vrsqrt.pop %v424
    %v441 = vrsqrt.pop %v425
    %v442 = vrsqrt.pop %v426
    %v443 = vrsqrt.pop %v427
    %v444 = vrsqrt.pop %v428
    %v445 = vrsqrt.pop %v429
    %v446 = vrsqrt.pop %v430
    %v447 = vrsqrt.pop %v431
    %v448 = vrsqrt.pop %v432
    %v449 = vrsqrt.pop %v433
    %v450 = vrsqrt.pop %v434
    %v451 = vrsqrt.pop %v435
    %v452 = vmul.f32 %v436, %v404
    %v453 = vmul.f32 %v437, %v405
    %v454 = vmul.f32 %v438, %v406
    %v455 = vmul.f32 %v439, %v407
    %v456 = vmul.f32 %v440, %v408
    %v457 = vmul.f32 %v441, %v409
    %v458 = vmul.f32 %v442, %v410
    %v459 = vmul.f32 %v443, %v411
    %v460 = vmul.f32 %v444, %v412
    %v461 = vmul.f32 %v445, %v413
    %v462 = vmul.f32 %v446, %v414
    %v463 = vmul.f32 %v447, %v415
    %v464 = vmul.f32 %v448, %v416
    %v465 = vmul.f32 %v449, %v417
    %v466 = vmul.f32 %v450, %v418
    %v467 = vmul.f32 %v451, %v419
    %v468 = vmul.f32 %v180, %v452
    %v469 = vmul.f32 %v181, %v453
    %v470 = vmul.f32 %v182, %v454
    %v471 = vmul.f32 %v183, %v455
    %v472 = vmul.f32 %v184, %v456
    %v473 = vmul.f32 %v185, %v457
    %v474 = vmul.f32 %v186, %v458
    %v475 = vmul.f32 %v187, %v459
    %v476 = vmul.f32 %v188, %v460
    %v477 = vmul.f32 %v189, %v461
    %v478 = vmul.f32 %v190, %v462
    %v479 = vmul.f32 %v191, %v463
    %v480 = vmul.f32 %v192, %v464
    %v481 = vmul.f32 %v193, %v465
    %v482 = vmul.f32 %v194, %v466
    %v483 = vmul.f32 %v195, %v467
    %500 = vrot.lane.b32.xlu0 %v468, 1
    %v501 = vpop.permute.xlu0 %500
    %502 = vrot.lane.b32.xlu0 %v469, 1
    %v503 = vpop.permute.xlu0 %502
    %504 = vrot.lane.b32.xlu0 %v470, 1
    %v505 = vpop.permute.xlu0 %504
    %506 = vrot.lane.b32.xlu0 %v471, 1
    %v507 = vpop.permute.xlu0 %506
    %508 = vrot.lane.b32.xlu0 %v472, 1
    %v509 = vpop.permute.xlu0 %508
    %510 = vrot.lane.b32.xlu0 %v473, 1
    %v511 = vpop.permute.xlu0 %510
    %512 = vrot.lane.b32.xlu0 %v474, 1
    %v513 = vpop.permute.xlu0 %512
    %514 = vrot.lane.b32.xlu0 %v475, 1
    %v515 = vpop.permute.xlu0 %514
    %516 = vrot.lane.b32.xlu0 %v476, 1
    %v517 = vpop.permute.xlu0 %516
    %518 = vrot.lane.b32.xlu0 %v477, 1
    %v519 = vpop.permute.xlu0 %518
    %520 = vrot.lane.b32.xlu0 %v478, 1
    %v521 = vpop.permute.xlu0 %520
    %522 = vrot.lane.b32.xlu0 %v479, 1
    %v523 = vpop.permute.xlu0 %522
    %524 = vrot.lane.b32.xlu0 %v480, 1
    %v525 = vpop.permute.xlu0 %524
    %526 = vrot.lane.b32.xlu0 %v481, 1
    %v527 = vpop.permute.xlu0 %526
    %528 = vrot.lane.b32.xlu0 %v482, 1
    %v529 = vpop.permute.xlu0 %528
    %530 = vrot.lane.b32.xlu0 %v483, 1
    %v531 = vpop.permute.xlu0 %530
    %v548 = vsub.f32 %v404, %v501
    %v549 = vsub.f32 %v405, %v503
    %v550 = vsub.f32 %v406, %v505
    %v551 = vsub.f32 %v407, %v507
    %v552 = vsub.f32 %v408, %v509
    %v553 = vsub.f32 %v409, %v511
    %v554 = vsub.f32 %v410, %v513
    %v555 = vsub.f32 %v411, %v515
    %v556 = vsub.f32 %v412, %v517
    %v557 = vsub.f32 %v413, %v519
    %v558 = vsub.f32 %v414, %v521
    %v559 = vsub.f32 %v415, %v523
    %v560 = vsub.f32 %v416, %v525
    %v561 = vsub.f32 %v417, %v527
    %v562 = vsub.f32 %v418, %v529
    %v563 = vsub.f32 %v419, %v531
    %v564 = vld [vmem:[%s2] sm:$0xff]
    %v565 = vld [vmem:[%s2 + $0x8] sm:$0xff]
    %v566 = vld [vmem:[%s3] sm:$0xf]
    %568 = vset.pattern.permute.xlu0 0
    %569 = vperm.xlu0 %568, %v452
    %v570 = vpop.permute.xlu0 %569
    %573 = vset.pattern.permute.xlu0 0
    %574 = vperm.xlu0 %573, %v453
    %v575 = vpop.permute.xlu0 %574
    %578 = vset.pattern.permute.xlu0 0
    %579 = vperm.xlu0 %578, %v454
    %v580 = vpop.permute.xlu0 %579
    %583 = vset.pattern.permute.xlu0 0
    %584 = vperm.xlu0 %583, %v455
    %v585 = vpop.permute.xlu0 %584
    %588 = vset.pattern.permute.xlu0 0
    %589 = vperm.xlu0 %588, %v456
    %v590 = vpop.permute.xlu0 %589
    %593 = vset.pattern.permute.xlu0 0
    %594 = vperm.xlu0 %593, %v457
    %v595 = vpop.permute.xlu0 %594
    %598 = vset.pattern.permute.xlu0 0
    %599 = vperm.xlu0 %598, %v458
    %v600 = vpop.permute.xlu0 %599
    %603 = vset.pattern.permute.xlu0 0
    %604 = vperm.xlu0 %603, %v459
    %v605 = vpop.permute.xlu0 %604
    %608 = vset.pattern.permute.xlu0 0
    %609 = vperm.xlu0 %608, %v460
    %v610 = vpop.permute.xlu0 %609
    %613 = vset.pattern.permute.xlu0 0
    %614 = vperm.xlu0 %613, %v461
    %v615 = vpop.permute.xlu0 %614
    %618 = vset.pattern.permute.xlu0 0
    %619 = vperm.xlu0 %618, %v462
    %v620 = vpop.permute.xlu0 %619
    %623 = vset.pattern.permute.xlu0 0
    %624 = vperm.xlu0 %623, %v463
    %v625 = vpop.permute.xlu0 %624
    %628 = vset.pattern.permute.xlu0 0
    %629 = vperm.xlu0 %628, %v464
    %v630 = vpop.permute.xlu0 %629
    %633 = vset.pattern.permute.xlu0 0
    %634 = vperm.xlu0 %633, %v465
    %v635 = vpop.permute.xlu0 %634
    %638 = vset.pattern.permute.xlu0 0
    %639 = vperm.xlu0 %638, %v466
    %v640 = vpop.permute.xlu0 %639
    %643 = vset.pattern.permute.xlu0 0
    %644 = vperm.xlu0 %643, %v467
    %v645 = vpop.permute.xlu0 %644
    %v647 = vmul.f32 %v18, %v570
    %v648 = vmul.f32 %v19, %v575
    %v649 = vmul.f32 %v20, %v580
    %v650 = vmul.f32 %v21, %v585
    %v651 = vmul.f32 %v22, %v590
    %v652 = vmul.f32 %v23, %v595
    %v653 = vmul.f32 %v24, %v600
    %v654 = vmul.f32 %v25, %v605
    %v655 = vmul.f32 %v26, %v610
    %v656 = vmul.f32 %v27, %v615
    %v657 = vmul.f32 %v28, %v620
    %v658 = vmul.f32 %v29, %v625
    %v659 = vmul.f32 %v30, %v630
    %v660 = vmul.f32 %v31, %v635
    %v661 = vmul.f32 %v32, %v640
    %v662 = vmul.f32 %v33, %v645
    %664 = vset.pattern.permute.xlu0 1
    %665 = vperm.xlu0 %664, %v548
    %v666 = vpop.permute.xlu0 %665
    %669 = vset.pattern.permute.xlu0 1
    %670 = vperm.xlu0 %669, %v549
    %v671 = vpop.permute.xlu0 %670
    %674 = vset.pattern.permute.xlu0 1
    %675 = vperm.xlu0 %674, %v550
    %v676 = vpop.permute.xlu0 %675
    %679 = vset.pattern.permute.xlu0 1
    %680 = vperm.xlu0 %679, %v551
    %v681 = vpop.permute.xlu0 %680
    %684 = vset.pattern.permute.xlu0 1
    %685 = vperm.xlu0 %684, %v552
    %v686 = vpop.permute.xlu0 %685
    %689 = vset.pattern.permute.xlu0 1
    %690 = vperm.xlu0 %689, %v553
    %v691 = vpop.permute.xlu0 %690
    %694 = vset.pattern.permute.xlu0 1
    %695 = vperm.xlu0 %694, %v554
    %v696 = vpop.permute.xlu0 %695
    %699 = vset.pattern.permute.xlu0 1
    %700 = vperm.xlu0 %699, %v555
    %v701 = vpop.permute.xlu0 %700
    %704 = vset.pattern.permute.xlu0 1
    %705 = vperm.xlu0 %704, %v556
    %v706 = vpop.permute.xlu0 %705
    %709 = vset.pattern.permute.xlu0 1
    %710 = vperm.xlu0 %709, %v557
    %v711 = vpop.permute.xlu0 %710
    %714 = vset.pattern.permute.xlu0 1
    %715 = vperm.xlu0 %714, %v558
    %v716 = vpop.permute.xlu0 %715
    %719 = vset.pattern.permute.xlu0 1
    %720 = vperm.xlu0 %719, %v559
    %v721 = vpop.permute.xlu0 %720
    %724 = vset.pattern.permute.xlu0 1
    %725 = vperm.xlu0 %724, %v560
    %v726 = vpop.permute.xlu0 %725
    %729 = vset.pattern.permute.xlu0 1
    %730 = vperm.xlu0 %729, %v561
    %v731 = vpop.permute.xlu0 %730
    %734 = vset.pattern.permute.xlu0 1
    %735 = vperm.xlu0 %734, %v562
    %v736 = vpop.permute.xlu0 %735
    %739 = vset.pattern.permute.xlu0 1
    %740 = vperm.xlu0 %739, %v563
    %v741 = vpop.permute.xlu0 %740
    %v743 = vadd.f32 %v647, %v666
    %v744 = vadd.f32 %v648, %v671
    %v745 = vadd.f32 %v649, %v676
    %v746 = vadd.f32 %v650, %v681
    %v747 = vadd.f32 %v651, %v686
    %v748 = vadd.f32 %v652, %v691
    %v749 = vadd.f32 %v653, %v696
    %v750 = vadd.f32 %v654, %v701
    %v751 = vadd.f32 %v655, %v706
    %v752 = vadd.f32 %v656, %v711
    %v753 = vadd.f32 %v657, %v716
    %v754 = vadd.f32 %v658, %v721
    %v755 = vadd.f32 %v659, %v726
    %v756 = vadd.f32 %v660, %v731
    %v757 = vadd.f32 %v661, %v736
    %v758 = vadd.f32 %v662, %v741
    %760 = vset.pattern.permute.xlu0 2
    %761 = vperm.xlu0 %760, %v404
    %v762 = vpop.permute.xlu0 %761
    %765 = vset.pattern.permute.xlu0 2
    %766 = vperm.xlu0 %765, %v405
    %v767 = vpop.permute.xlu0 %766
    %769 = vmatprep.subr.mxu0 0.0
    %770 = vmatpush1.msra.mxu0 %v743
    %771 = vmatprep.subr.mxu0 0.0
    %772 = vmatpush1.msra.mxu0 %v744
    %773 = vmatprep.subr.mxu0 0.0
    %774 = vmatpush1.msra.mxu0 %v745
    %775 = vmatprep.subr.mxu0 0.0
    %776 = vmatpush1.msra.mxu0 %v746
    %777 = vmatprep.subr.mxu0 0.0
    %778 = vmatpush1.msra.mxu0 %v747
    %779 = vmatprep.subr.mxu0 0.0
    %780 = vmatpush1.msra.mxu0 %v748
    %781 = vmatprep.subr.mxu0 0.0
    %782 = vmatpush1.msra.mxu0 %v749
    %783 = vmatprep.subr.mxu0 0.0
    %784 = vmatpush1.msra.mxu0 %v750
    %785 = vmatprep.subr.mxu0 0.0
    %786 = vmatpush1.msra.mxu0 %v751
    %787 = vmatprep.subr.mxu0 0.0
    %788 = vmatpush1.msra.mxu0 %v752
    %789 = vmatprep.subr.mxu0 0.0
    %790 = vmatpush1.msra.mxu0 %v753
    %791 = vmatprep.subr.mxu0 0.0
    %792 = vmatpush1.msra.mxu0 %v754
    %793 = vmatprep.subr.mxu0 0.0
    %794 = vmatpush1.msra.mxu0 %v755
    %795 = vmatprep.subr.mxu0 0.0
    %796 = vmatpush1.msra.mxu0 %v756
    %797 = vmatprep.subr.mxu0 0.0
    %798 = vmatpush1.msra.mxu0 %v757
    %799 = vmatprep.subr.mxu0 0.0
    %800 = vmatpush1.msra.mxu0 %v758
    %801 = vmatprep.subr.mxu0 0.0
    %802 = vmatpush1.msra.mxu0 0.0
    %803 = vmatprep.subr.mxu0 0.0
    %804 = vmatpush1.msra.mxu0 0.0
    %805 = vmatprep.subr.mxu0 0.0
    %806 = vmatpush1.msra.mxu0 0.0
    %807 = vmatprep.subr.mxu0 0.0
    %808 = vmatpush1.msra.mxu0 0.0
    %809 = vmatprep.subr.mxu0 0.0
    %810 = vmatpush1.msra.mxu0 0.0
    %811 = vmatprep.subr.mxu0 0.0
    %812 = vmatpush1.msra.mxu0 0.0
    %813 = vmatprep.subr.mxu0 0.0
    %814 = vmatpush1.msra.mxu0 0.0
    %815 = vmatprep.subr.mxu0 0.0
    %816 = vmatpush1.msra.mxu0 0.0
    %817 = vmatprep.subr.mxu0 0.0
    %818 = vmatpush1.msra.mxu0 0.0
    %819 = vmatprep.subr.mxu0 0.0
    %820 = vmatpush1.msra.mxu0 0.0
    %821 = vmatprep.subr.mxu0 0.0
    %822 = vmatpush1.msra.mxu0 0.0
    %823 = vmatprep.subr.mxu0 0.0
    %824 = vmatpush1.msra.mxu0 0.0
    %825 = vmatprep.subr.mxu0 0.0
    %826 = vmatpush1.msra.mxu0 0.0
    %827 = vmatprep.subr.mxu0 0.0
    %828 = vmatpush1.msra.mxu0 0.0
    %829 = vmatprep.subr.mxu0 0.0
    %830 = vmatpush1.msra.mxu0 0.0
    %831 = vmatprep.subr.mxu0 0.0
    %832 = vmatpush1.msra.mxu0 0.0
    %833 = vmatprep.mubr.f32.mxu0 0.0
    %834 = vmatmul.mubr.f32.gmra.mrb[0].mxu0 %v564
    %v835 = vpop.f32.mrb[0].mxu0
    %v836 = vadd.f32 %v762, %v835
    %v837 = vpop.f32.mrb[0].mxu0
    %838 = vmatprep.mubr.f32.mxu0 0.0
    %839 = vmatmul.mubr.f32.gmra.mrb[0].mxu0 %v565
    %v840 = vpop.f32.mrb[0].mxu0
    %v841 = vadd.f32 %v767, %v840
    %v842 = vpop.f32.mrb[0].mxu0
    %843 = vdwg.mxu0
    %v844 = vmul.f32 %v836, 0.5
    %v845 = vmul.f32 %v841, 0.5
    %v846 = vmul.f32 %v836, 0.70710677
    %v847 = vmul.f32 %v841, 0.70710677
    %v848 = verf.f32.pop %v846
    %v849 = verf.f32.pop %v847
    %v850 = vadd.f32 %v848, 1.0
    %v851 = vadd.f32 %v849, 1.0
    %v852 = vmul.f32 %v844, %v850
    %v853 = vmul.f32 %v845, %v851
    %854 = vset.pattern.permute.xlu0 3
    %855 = vperm.xlu0 %854, %v404
    %v856 = vpop.permute.xlu0 %855
    %vm858 = vcmask 130048
    %v860 = vsel %vm858, %v566, 0
    %862 = vmatprep.subr.mxu0 0.0
    %863 = vmatpush1.msra.mxu0 %v852
    %864 = vmatprep.subr.mxu0 0.0
    %865 = vmatpush1.msra.mxu0 %v853
    %866 = vmatprep.subr.mxu0 0.0
    %867 = vmatpush1.msra.mxu0 0.0
    %868 = vmatprep.subr.mxu0 0.0
    %869 = vmatpush1.msra.mxu0 0.0
    %870 = vmatprep.subr.mxu0 0.0
    %871 = vmatpush1.msra.mxu0 0.0
    %872 = vmatprep.subr.mxu0 0.0
    %873 = vmatpush1.msra.mxu0 0.0
    %874 = vmatprep.subr.mxu0 0.0
    %875 = vmatpush1.msra.mxu0 0.0
    %876 = vmatprep.subr.mxu0 0.0
    %877 = vmatpush1.msra.mxu0 0.0
    %878 = vmatprep.subr.mxu0 0.0
    %879 = vmatpush1.msra.mxu0 0.0
    %880 = vmatprep.subr.mxu0 0.0
    %881 = vmatpush1.msra.mxu0 0.0
    %882 = vmatprep.subr.mxu0 0.0
    %883 = vmatpush1.msra.mxu0 0.0
    %884 = vmatprep.subr.mxu0 0.0
    %885 = vmatpush1.msra.mxu0 0.0
    %886 = vmatprep.subr.mxu0 0.0
    %887 = vmatpush1.msra.mxu0 0.0
    %888 = vmatprep.subr.mxu0 0.0
    %889 = vmatpush1.msra.mxu0 0.0
    %890 = vmatprep.subr.mxu0 0.0
    %891 = vmatpush1.msra.mxu0 0.0
    %892 = vmatprep.subr.mxu0 0.0
    %893 = vmatpush1.msra.mxu0 0.0
    %894 = vmatprep.subr.mxu0 0.0
    %895 = vmatpush1.msra.mxu0 0.0
    %896 = vmatprep.subr.mxu0 0.0
    %897 = vmatpush1.msra.mxu0 0.0
    %898 = vmatprep.subr.mxu0 0.0
    %899 = vmatpush1.msra.mxu0 0.0
    %900 = vmatprep.subr.mxu0 0.0
    %901 = vmatpush1.msra.mxu0 0.0
    %902 = vmatprep.subr.mxu0 0.0
    %903 = vmatpush1.msra.mxu0 0.0
    %904 = vmatprep.subr.mxu0 0.0
    %905 = vmatpush1.msra.mxu0 0.0
    %906 = vmatprep.subr.mxu0 0.0
    %907 = vmatpush1.msra.mxu0 0.0
    %908 = vmatprep.subr.mxu0 0.0
    %909 = vmatpush1.msra.mxu0 0.0
    %910 = vmatprep.subr.mxu0 0.0
    %911 = vmatpush1.msra.mxu0 0.0
    %912 = vmatprep.subr.mxu0 0.0
    %913 = vmatpush1.msra.mxu0 0.0
    %914 = vmatprep.subr.mxu0 0.0
    %915 = vmatpush1.msra.mxu0 0.0
    %916 = vmatprep.subr.mxu0 0.0
    %917 = vmatpush1.msra.mxu0 0.0
    %918 = vmatprep.subr.mxu0 0.0
    %919 = vmatpush1.msra.mxu0 0.0
    %920 = vmatprep.subr.mxu0 0.0
    %921 = vmatpush1.msra.mxu0 0.0
    %922 = vmatprep.subr.mxu0 0.0
    %923 = vmatpush1.msra.mxu0 0.0
    %924 = vmatprep.subr.mxu0 0.0
    %925 = vmatpush1.msra.mxu0 0.0
    %926 = vmatprep.mubr.f32.mxu0 0.0
    %927 = vmatmul.mubr.f32.gmra.mrb[0].mxu0 %v860
    %v928 = vpop.f32.mrb[0].mxu0
    %v929 = vadd.f32 %v856, %v928
    %v930 = vpop.f32.mrb[0].mxu0
    %931 = vdwg.mxu0
    %vm932 = vcmask 93184
    %933 = vst.msk [vmem:[#allocation2] sm:$0xf] %vm932, %v929
    %v934 = vmul.f32 %v35, %v570
    %v935 = vmul.f32 %v36, %v575
    %v936 = vmul.f32 %v37, %v580
    %v937 = vmul.f32 %v38, %v585
    %v938 = vmul.f32 %v39, %v590
    %v939 = vmul.f32 %v40, %v595
    %v940 = vmul.f32 %v41, %v600
    %v941 = vmul.f32 %v42, %v605
    %v942 = vmul.f32 %v43, %v610
    %v943 = vmul.f32 %v44, %v615
    %v944 = vmul.f32 %v45, %v620
    %v945 = vmul.f32 %v46, %v625
    %v946 = vmul.f32 %v47, %v630
    %v947 = vmul.f32 %v48, %v635
    %v948 = vmul.f32 %v49, %v640
    %v949 = vmul.f32 %v50, %v645
    %v950 = vadd.f32 %v934, %v666
    %v951 = vadd.f32 %v935, %v671
    %v952 = vadd.f32 %v936, %v676
    %v953 = vadd.f32 %v937, %v681
    %v954 = vadd.f32 %v938, %v686
    %v955 = vadd.f32 %v939, %v691
    %v956 = vadd.f32 %v940, %v696
    %v957 = vadd.f32 %v941, %v701
    %v958 = vadd.f32 %v942, %v706
    %v959 = vadd.f32 %v943, %v711
    %v960 = vadd.f32 %v944, %v716
    %v961 = vadd.f32 %v945, %v721
    %v962 = vadd.f32 %v946, %v726
    %v963 = vadd.f32 %v947, %v731
    %v964 = vadd.f32 %v948, %v736
    %v965 = vadd.f32 %v949, %v741
    %966 = vmatprep.subr.mxu0 0.0
    %967 = vmatpush1.msra.mxu0 %v950
    %968 = vmatprep.subr.mxu0 0.0
    %969 = vmatpush1.msra.mxu0 %v951
    %970 = vmatprep.subr.mxu0 0.0
    %971 = vmatpush1.msra.mxu0 %v952
    %972 = vmatprep.subr.mxu0 0.0
    %973 = vmatpush1.msra.mxu0 %v953
    %974 = vmatprep.subr.mxu0 0.0
    %975 = vmatpush1.msra.mxu0 %v954
    %976 = vmatprep.subr.mxu0 0.0
    %977 = vmatpush1.msra.mxu0 %v955
    %978 = vmatprep.subr.mxu0 0.0
    %979 = vmatpush1.msra.mxu0 %v956
    %980 = vmatprep.subr.mxu0 0.0
    %981 = vmatpush1.msra.mxu0 %v957
    %982 = vmatprep.subr.mxu0 0.0
    %983 = vmatpush1.msra.mxu0 %v958
    %984 = vmatprep.subr.mxu0 0.0
    %985 = vmatpush1.msra.mxu0 %v959
    %986 = vmatprep.subr.mxu0 0.0
    %987 = vmatpush1.msra.mxu0 %v960
    %988 = vmatprep.subr.mxu0 0.0
    %989 = vmatpush1.msra.mxu0 %v961
    %990 = vmatprep.subr.mxu0 0.0
    %991 = vmatpush1.msra.mxu0 %v962
    %992 = vmatprep.subr.mxu0 0.0
    %993 = vmatpush1.msra.mxu0 %v963
    %994 = vmatprep.subr.mxu0 0.0
    %995 = vmatpush1.msra.mxu0 %v964
    %996 = vmatprep.subr.mxu0 0.0
    %997 = vmatpush1.msra.mxu0 %v965
    %998 = vmatprep.subr.mxu0 0.0
    %999 = vmatpush1.msra.mxu0 0.0
    %1000 = vmatprep.subr.mxu0 0.0
    %1001 = vmatpush1.msra.mxu0 0.0
    %1002 = vmatprep.subr.mxu0 0.0
    %1003 = vmatpush1.msra.mxu0 0.0
    %1004 = vmatprep.subr.mxu0 0.0
    %1005 = vmatpush1.msra.mxu0 0.0
    %1006 = vmatprep.subr.mxu0 0.0
    %1007 = vmatpush1.msra.mxu0 0.0
    %1008 = vmatprep.subr.mxu0 0.0
    %1009 = vmatpush1.msra.mxu0 0.0
    %1010 = vmatprep.subr.mxu0 0.0
    %1011 = vmatpush1.msra.mxu0 0.0
    %1012 = vmatprep.subr.mxu0 0.0
    %1013 = vmatpush1.msra.mxu0 0.0
    %1014 = vmatprep.subr.mxu0 0.0
    %1015 = vmatpush1.msra.mxu0 0.0
    %1016 = vmatprep.subr.mxu0 0.0
    %1017 = vmatpush1.msra.mxu0 0.0
    %1018 = vmatprep.subr.mxu0 0.0
    %1019 = vmatpush1.msra.mxu0 0.0
    %1020 = vmatprep.subr.mxu0 0.0
    %1021 = vmatpush1.msra.mxu0 0.0
    %1022 = vmatprep.subr.mxu0 0.0
    %1023 = vmatpush1.msra.mxu0 0.0
    %1024 = vmatprep.subr.mxu0 0.0
    %1025 = vmatpush1.msra.mxu0 0.0
    %1026 = vmatprep.subr.mxu0 0.0
    %1027 = vmatpush1.msra.mxu0 0.0
    %1028 = vmatprep.subr.mxu0 0.0
    %1029 = vmatpush1.msra.mxu0 0.0
    %1030 = vmatprep.mubr.f32.mxu0 0.0
    %1031 = vmatmul.mubr.f32.gmra.mrb[0].mxu0 %v564
    %v1032 = vpop.f32.mrb[0].mxu0
    %v1033 = vadd.f32 %v762, %v1032
    %v1034 = vpop.f32.mrb[0].mxu0
    %1035 = vmatprep.mubr.f32.mxu0 0.0
    %1036 = vmatmul.mubr.f32.gmra.mrb[0].mxu0 %v565
    %v1037 = vpop.f32.mrb[0].mxu0
    %v1038 = vadd.f32 %v767, %v1037
    %v1039 = vpop.f32.mrb[0].mxu0
    %1040 = vdwg.mxu0
    %v1041 = vmul.f32 %v1033, 0.5
    %v1042 = vmul.f32 %v1038, 0.5
    %v1043 = vmul.f32 %v1033, 0.70710677
    %v1044 = vmul.f32 %v1038, 0.70710677
    %v1045 = verf.f32.pop %v1043
    %v1046 = verf.f32.pop %v1044
    %v1047 = vadd.f32 %v1045, 1.0
    %v1048 = vadd.f32 %v1046, 1.0
    %v1049 = vmul.f32 %v1041, %v1047
    %v1050 = vmul.f32 %v1042, %v1048
    %1051 = vmatprep.subr.mxu0 0.0
    %1052 = vmatpush1.msra.mxu0 %v1049
    %1053 = vmatprep.subr.mxu0 0.0
    %1054 = vmatpush1.msra.mxu0 %v1050
    %1055 = vmatprep.subr.mxu0 0.0
    %1056 = vmatpush1.msra.mxu0 0.0
    %1057 = vmatprep.subr.mxu0 0.0
    %1058 = vmatpush1.msra.mxu0 0.0
    %1059 = vmatprep.subr.mxu0 0.0
    %1060 = vmatpush1.msra.mxu0 0.0
    %1061 = vmatprep.subr.mxu0 0.0
    %1062 = vmatpush1.msra.mxu0 0.0
    %1063 = vmatprep.subr.mxu0 0.0
    %1064 = vmatpush1.msra.mxu0 0.0
    %1065 = vmatprep.subr.mxu0 0.0
    %1066 = vmatpush1.msra.mxu0 0.0
    %1067 = vmatprep.subr.mxu0 0.0
    %1068 = vmatpush1.msra.mxu0 0.0
    %1069 = vmatprep.subr.mxu0 0.0
    %1070 = vmatpush1.msra.mxu0 0.0
    %1071 = vmatprep.subr.mxu0 0.0
    %1072 = vmatpush1.msra.mxu0 0.0
    %1073 = vmatprep.subr.mxu0 0.0
    %1074 = vmatpush1.msra.mxu0 0.0
    %1075 = vmatprep.subr.mxu0 0.0
    %1076 = vmatpush1.msra.mxu0 0.0
    %1077 = vmatprep.subr.mxu0 0.0
    %1078 = vmatpush1.msra.mxu0 0.0
    %1079 = vmatprep.subr.mxu0 0.0
    %1080 = vmatpush1.msra.mxu0 0.0
    %1081 = vmatprep.subr.mxu0 0.0
    %1082 = vmatpush1.msra.mxu0 0.0
    %1083 = vmatprep.subr.mxu0 0.0
    %1084 = vmatpush1.msra.mxu0 0.0
    %1085 = vmatprep.subr.mxu0 0.0
    %1086 = vmatpush1.msra.mxu0 0.0
    %1087 = vmatprep.subr.mxu0 0.0
    %1088 = vmatpush1.msra.mxu0 0.0
    %1089 = vmatprep.subr.mxu0 0.0
    %1090 = vmatpush1.msra.mxu0 0.0
    %1091 = vmatprep.subr.mxu0 0.0
    %1092 = vmatpush1.msra.mxu0 0.0
    %1093 = vmatprep.subr.mxu0 0.0
    %1094 = vmatpush1.msra.mxu0 0.0
    %1095 = vmatprep.subr.mxu0 0.0
    %1096 = vmatpush1.msra.mxu0 0.0
    %1097 = vmatprep.subr.mxu0 0.0
    %1098 = vmatpush1.msra.mxu0 0.0
    %1099 = vmatprep.subr.mxu0 0.0
    %1100 = vmatpush1.msra.mxu0 0.0
    %1101 = vmatprep.subr.mxu0 0.0
    %1102 = vmatpush1.msra.mxu0 0.0
    %1103 = vmatprep.subr.mxu0 0.0
    %1104 = vmatpush1.msra.mxu0 0.0
    %1105 = vmatprep.subr.mxu0 0.0
    %1106 = vmatpush1.msra.mxu0 0.0
    %1107 = vmatprep.subr.mxu0 0.0
    %1108 = vmatpush1.msra.mxu0 0.0
    %1109 = vmatprep.subr.mxu0 0.0
    %1110 = vmatpush1.msra.mxu0 0.0
    %1111 = vmatprep.subr.mxu0 0.0
    %1112 = vmatpush1.msra.mxu0 0.0
    %1113 = vmatprep.subr.mxu0 0.0
    %1114 = vmatpush1.msra.mxu0 0.0
    %1115 = vmatprep.mubr.f32.mxu0 0.0
    %1116 = vmatmul.mubr.f32.gmra.mrb[0].mxu0 %v860
    %v1117 = vpop.f32.mrb[0].mxu0
    %v1118 = vadd.f32 %v856, %v1117
    %v1119 = vpop.f32.mrb[0].mxu0
    %1120 = vdwg.mxu0
    %s1121 = scalar_lea.vmem [#allocation2], 4
    %1122 = vst.msk [vmem:[%s1121] sm:$0xf] %vm932, %v1118
    // Predicated region
    $region18: #{spatial_recon_forward.1} parent=1 // pred_check
      _
    $region19: #{spatial_recon_forward.1} parent=1 // pred_check_branch
      %1124 = sbr.rel (0) target = $region21
    $region20: #{spatial_recon_forward.1} parent=1 // pred_region
      %s1126 = ssub.s32 128, 128
      %1127 = vsyncadd [#allocation3], %s1126
      %s1128 = sshll.u32 [#allocation2], 4
      %s1129 = int_to_ptr.vmem [resolvable:$true] %s1128
      %1134 = dma.vmem_to_hbm [thread:$0]  %s1129, 128, %s4, [#allocation3], 64, 64, 4
    $region21: #{spatial_recon_forward.1} parent=1 // pred_fallthru
      _
    // Predicated region
    $region22: #{spatial_recon_forward.1} parent=1 // pred_check
      _
    $region23: #{spatial_recon_forward.1} parent=1 // pred_check_branch
      %1136 = sbr.rel (0) target = $region25
    $region24: #{spatial_recon_forward.1} parent=1 // pred_region
      %1137 = dma.done [#allocation3], 128
    $region25: #{spatial_recon_forward.1} parent=1 // pred_fallthru
      _
    %1138 = vsyncpa [#allocation3], 1

</llo_original>
